<compile_context>
chip_gen: v5e
topology: v5e:2x2
jax: 0.10.0
libtpu: 0.0.40
codegen_flags: <defaults>
</compile_context>

<pallas_src>
import functools

import jax
import jax.numpy as jnp
from jax.experimental import pallas as pl
from jax.experimental.pallas import tpu as pltpu


def _round_up(x, m):
    return (x + m - 1) // m * m


def _cdiv(a, b):
    return (a + b - 1) // b


def _sce_kernel(logits_ref, labels_ref, out_ref, *, alpha, num_classes, n_valid,
                tile_n):
    """One row tile of label-smoothed CE; writes a lane-dense partial sum."""
    i = pl.program_id(0)

    x = logits_ref[...].astype(jnp.float32)                  # (tile_n, C)

    # Numerically stable log-sum-exp; (x - m) has a single consumer (exp).
    m = jnp.max(x, axis=-1, keepdims=True)                   # (tile_n, 1)
    sum_exp = jnp.sum(jnp.exp(x - m), axis=-1, keepdims=True)
    lse = m + jnp.log(sum_exp)                                # (tile_n, 1)

    # Fused weighted linear term (no one-hot / target_probs materialization):
    #   loss = lse - sum_j w_j * x_j
    #   w_label = 1 - alpha + alpha/C,   w_other = alpha/C
    labels = labels_ref[...]                                  # (tile_n, 1) int32
    classes = jax.lax.broadcasted_iota(jnp.int32, x.shape, 1)
    off = alpha / num_classes
    w = jnp.where(classes == labels, 1.0 - alpha + off, off)  # (tile_n, C)
    lin = jnp.sum(w * x, axis=-1, keepdims=True)              # (tile_n, 1)

    row_loss = lse - lin                                      # (tile_n, 1)

    # Zero rows that lie past the real batch (overhanging last tile).  The
    # mask is applied before any cross-row reduction so garbage cannot leak.
    row_ids = i * tile_n + jax.lax.broadcasted_iota(jnp.int32, (tile_n, 1), 0)
    row_loss = jnp.where(row_ids < n_valid, row_loss, 0.0)

    partial = jnp.sum(row_loss)                               # scalar f32
    # Lane-dense per-tile output (exactly one vreg); wrapper reads [:, 0, 0].
    out_ref[...] = jnp.zeros(out_ref.shape, jnp.float32) + partial


def smooth_cross_entropy(logits, labels, *, alpha=0.1, tile_n=None):
    """logits: (N, C) float, labels: (N,) int -> scalar f32 loss (batch mean)."""
    n, c = logits.shape
    itemsize = jnp.dtype(logits.dtype).itemsize
    # Sub-32-bit dtypes pack along sublanes: 8 rows f32, 16 bf16, 32 int8/fp8.
    mult = max(8, 32 // max(1, itemsize))

    kind = ""
    try:
        kind = jax.devices()[0].device_kind.lower()
    except Exception:
        pass
    is_v7 = "v7" in kind

    # ---- row-tile auto-sizer: sized by the *input* dtype for DMA granularity.
    if tile_n is None:
        budget_in_bytes = (4 if is_v7 else 8) * 1024 * 1024
        rows_fit = max(mult, budget_in_bytes // max(1, c * itemsize))
        tile_n = max(mult, min(4096, (rows_fit // mult) * mult))
        tile_n = min(tile_n, _round_up(n, mult))
        if is_v7 and tile_n >= n and n > mult:
            # Guarantee >= 2 "parallel" tiles so both v7x TensorCores get work.
            tile_n = _round_up(_cdiv(n, 2), mult)
    assert tile_n % mult == 0, (
        f"tile_n must be a multiple of {mult} for dtype {logits.dtype}")

    num_tiles = _cdiv(n, tile_n)          # overhanging last tile handled in-kernel
    labels2d = labels.astype(jnp.int32).reshape(n, 1)

    kernel = functools.partial(
        _sce_kernel, alpha=float(alpha), num_classes=c, n_valid=n, tile_n=tile_n)

    # VMEM accounting: double-buffered input block + ~3 f32 temporaries
    # (x upcast, weights, exp temp) + headroom.  Floor 32 MiB (>= v5e scoped
    # default), cap per generation (v7x has only 64 MiB physical VMEM).
    in_block = tile_n * c * itemsize
    f32_block = tile_n * c * 4
    need = 2 * in_block + 3 * f32_block + (2 << 20)
    cap = (40 << 20) if is_v7 else (96 << 20)
    vmem_limit = int(min(cap, max(32 << 20, need)))

    cost = pl.CostEstimate(
        flops=6 * n * c,
        transcendentals=n * c,
        bytes_accessed=n * c * itemsize + n * 4 + num_tiles * 8 * 128 * 4,
    )

    partials = pl.pallas_call(
        kernel,
        out_shape=jax.ShapeDtypeStruct((num_tiles, 8, 128), jnp.float32),
        grid_spec=pltpu.PrefetchScalarGridSpec(
            num_scalar_prefetch=0,
            grid=(num_tiles,),
            in_specs=[
                pl.BlockSpec((tile_n, c), lambda i: (i, 0)),   # logits row tile
                pl.BlockSpec((tile_n, 1), lambda i: (i, 0)),   # labels row tile
            ],
            out_specs=pl.BlockSpec((1, 8, 128), lambda i: (i, 0, 0)),
        ),
        compiler_params=pltpu.CompilerParams(
            dimension_semantics=("parallel",),                 # independent tiles
            vmem_limit_bytes=vmem_limit,
        ),
        cost_estimate=cost,
    )(logits, labels2d)

    return jnp.sum(partials[:, 0, 0]) / jnp.float32(n)


def _reference(logits, labels, alpha=0.1):
    num_classes = logits.shape[-1]
    logp = jax.nn.log_softmax(logits.astype(jnp.float32), axis=-1)
    onehot = jax.nn.one_hot(labels, num_classes, dtype=jnp.float32)
    tp = onehot * (1.0 - alpha) + alpha / num_classes
    return jnp.mean(-jnp.sum(tp * logp, axis=-1))


if __name__ == "__main__":
    key = jax.random.PRNGKey(0)
    k1, k2, k3, k4, k5, k6 = jax.random.split(key, 6)

    # small demo shape consistent with the module: batch=16, num_classes=32
    N, C = 16, 32
    logits = jax.random.normal(k1, (N, C), dtype=jnp.float32)
    labels = jax.random.randint(k2, (N,), 0, C, dtype=jnp.int32)

    loss = jax.block_until_ready(smooth_cross_entropy(logits, labels, alpha=0.1))
    ref = _reference(logits, labels, alpha=0.1)
    assert jnp.allclose(loss, ref, atol=1e-5, rtol=1e-5), (loss, ref)

    # alpha == 0 path (plain cross entropy) uses the same decomposition
    loss0 = jax.block_until_ready(smooth_cross_entropy(logits, labels, alpha=0.0))
    ref0 = _reference(logits, labels, alpha=0.0)
    assert jnp.allclose(loss0, ref0, atol=1e-5, rtol=1e-5), (loss0, ref0)

    # ragged batch: no wrapper pad -- exercises the overhanging last tile and
    # the in-kernel row mask across a multi-tile parallel grid
    N2 = 13
    logits2 = jax.random.normal(k3, (N2, C), dtype=jnp.float32)
    labels2 = jax.random.randint(k4, (N2,), 0, C, dtype=jnp.int32)
    loss2 = jax.block_until_ready(
        smooth_cross_entropy(logits2, labels2, alpha=0.1, tile_n=8))
    ref2 = _reference(logits2, labels2, alpha=0.1)
    assert jnp.allclose(loss2, ref2, atol=1e-5, rtol=1e-5), (loss2, ref2)

    # bf16 logits: exercises dtype-aware sublane multiple (16) and in-kernel upcast
    N3 = 32
    logits3 = jax.random.normal(k5, (N3, C), dtype=jnp.float32).astype(jnp.bfloat16)
    labels3 = jax.random.randint(k6, (N3,), 0, C, dtype=jnp.int32)
    loss3 = jax.block_until_ready(smooth_cross_entropy(logits3, labels3, alpha=0.1))
    ref3 = _reference(logits3, labels3, alpha=0.1)
    assert jnp.allclose(loss3, ref3, atol=1e-4, rtol=1e-4), (loss3, ref3)

    print("KERNEL_OK")
</pallas_src>

<mosaic_0001>
module attributes {stable_mosaic.version = 11 : i64} {
  func.func @_sce_kernel(%arg0: i32, %arg1: memref<16x32xf32, #tpu.memory_space<vmem>>, %arg2: memref<16x1xi32, #tpu.memory_space<vmem>>, %arg3: memref<1x8x128xf32, #tpu.memory_space<vmem>>) attributes {dimension_semantics = [#tpu.dimension_semantics<parallel>], iteration_bounds = array<i64: 1>, scalar_prefetch = 0 : i64, scratch_operands = 0 : i64, tpu.core_type = #tpu.core_type<tc>, window_params = [{transform_indices = @transform_0, window_bounds = array<i64: 16, 32>}, {transform_indices = @transform_1, window_bounds = array<i64: 16, 1>}, {transform_indices = @transform_2, window_bounds = array<i64: 1, 8, 128>}]} {
    %c0 = arith.constant 0 : index
    %c0_0 = arith.constant 0 : index
    %0 = vector.load %arg1[%c0, %c0_0] : memref<16x32xf32, #tpu.memory_space<vmem>>, vector<16x32xf32>
    %cst = arith.constant dense<0xFF800000> : vector<16xf32>
    %1 = vector.multi_reduction <maximumf>, %0, %cst [1] : vector<16x32xf32> to vector<16xf32>
    %2 = vector.shape_cast %1 : vector<16xf32> to vector<16x1xf32>
    %3 = vector.broadcast %2 : vector<16x1xf32> to vector<16x32xf32>
    %4 = arith.subf %0, %3 : vector<16x32xf32>
    %5 = math.exp %4 : vector<16x32xf32>
    %cst_1 = arith.constant dense<0.000000e+00> : vector<16xf32>
    %6 = vector.multi_reduction <add>, %5, %cst_1 [1] : vector<16x32xf32> to vector<16xf32>
    %7 = vector.shape_cast %6 : vector<16xf32> to vector<16x1xf32>
    %8 = math.log %7 : vector<16x1xf32>
    %9 = arith.addf %2, %8 : vector<16x1xf32>
    %c0_2 = arith.constant 0 : index
    %c0_3 = arith.constant 0 : index
    %10 = vector.load %arg2[%c0_2, %c0_3] : memref<16x1xi32, #tpu.memory_space<vmem>>, vector<16x1xi32>
    %11 = tpu.iota {dimensions = array<i32: 1>} : vector<16x32xi32>
    %12 = vector.broadcast %10 : vector<16x1xi32> to vector<16x32xi32>
    %13 = arith.cmpi eq, %11, %12 : vector<16x32xi32>
    %cst_4 = arith.constant 0.903124988 : f32
    %cst_5 = arith.constant 3.125000e-03 : f32
    %14 = vector.broadcast %cst_4 : f32 to vector<16x32xf32>
    %15 = vector.broadcast %cst_5 : f32 to vector<16x32xf32>
    %16 = arith.select %13, %14, %15 : vector<16x32xi1>, vector<16x32xf32>
    %17 = arith.mulf %16, %0 : vector<16x32xf32>
    %cst_6 = arith.constant dense<0.000000e+00> : vector<16xf32>
    %18 = vector.multi_reduction <add>, %17, %cst_6 [1] : vector<16x32xf32> to vector<16xf32>
    %19 = vector.shape_cast %18 : vector<16xf32> to vector<16x1xf32>
    %20 = arith.subf %9, %19 : vector<16x1xf32>
    %c16_i32 = arith.constant 16 : i32
    %21 = arith.muli %arg0, %c16_i32 : i32
    %22 = tpu.iota {dimensions = array<i32: 0>} : vector<16x1xi32>
    %23 = vector.broadcast %21 : i32 to vector<16x1xi32>
    %24 = arith.addi %23, %22 : vector<16x1xi32>
    %c16_i32_7 = arith.constant 16 : i32
    %25 = vector.broadcast %c16_i32_7 : i32 to vector<16x1xi32>
    %26 = arith.cmpi slt, %24, %25 : vector<16x1xi32>
    %cst_8 = arith.constant 0.000000e+00 : f32
    %27 = vector.broadcast %cst_8 : f32 to vector<16x1xf32>
    %28 = arith.select %26, %20, %27 : vector<16x1xi1>, vector<16x1xf32>
    %29 = vector.shape_cast %28 : vector<16x1xf32> to vector<1x16x1xf32>
    %cst_9 = arith.constant dense<0.000000e+00> : vector<1xf32>
    %30 = vector.multi_reduction <add>, %29, %cst_9 [1, 2] : vector<1x16x1xf32> to vector<1xf32>
    %31 = vector.shape_cast %30 : vector<1xf32> to vector<1x1x1xf32>
    %32 = vector.extract %31[0, 0, 0] : f32 from vector<1x1x1xf32>
    %cst_10 = arith.constant 0.000000e+00 : f32
    %33 = vector.broadcast %cst_10 : f32 to vector<1x8x128xf32>
    %34 = vector.broadcast %32 : f32 to vector<1x8x128xf32>
    %35 = arith.addf %33, %34 : vector<1x8x128xf32>
    %c0_11 = arith.constant 0 : index
    %c0_12 = arith.constant 0 : index
    %c0_13 = arith.constant 0 : index
    %36 = vector.load %arg3[%c0_11, %c0_12, %c0_13] : memref<1x8x128xf32, #tpu.memory_space<vmem>>, vector<1x8x128xf32>
    tpu.vector_store %arg3[%c0_11, %c0_12, %c0_13], %35 {strides = array<i32>} : memref<1x8x128xf32, #tpu.memory_space<vmem>>, vector<1x8x128xf32>,
    return
  }
  func.func @transform_0(%arg0: i32) -> (i32, i32) {
    %c0_i32 = arith.constant 0 : i32
    %c0_i32_0 = arith.constant 0 : i32
    return %arg0, %c0_i32 : i32, i32
  }
  func.func @transform_1(%arg0: i32) -> (i32, i32) {
    %c0_i32 = arith.constant 0 : i32
    %c0_i32_0 = arith.constant 0 : i32
    return %arg0, %c0_i32 : i32, i32
  }
  func.func @transform_2(%arg0: i32) -> (i32, i32, i32) {
    %c0_i32 = arith.constant 0 : i32
    %c0_i32_0 = arith.constant 0 : i32
    %c0_i32_1 = arith.constant 0 : i32
    return %arg0, %c0_i32, %c0_i32_0 : i32, i32, i32
  }
}

</mosaic_0001>

<llo_original>
// kernel: tpu_custom_call.1
$region0: #{tpu_custom_call.1}
  #allocation0 [shape = 'u32[]', space=smem, size = 0x4, offset = 0x4, fixed_abs, tag = 'smem constant byte address 0x4 - core index']
  #allocation1 [shape = 'u32[72,128]{1,0:T(1,128)}', space=vmem, size = 0x9000, scoped, tag = 'internal scratch']
  %s0 = inlined_call_operand.vmem [shape: f32[16,32], index: 0, kind: input, shape index: {}]
  %s1 = inlined_call_operand.vmem [shape: s32[16,1], index: 1, kind: input, shape index: {}]
  %s2 = inlined_call_operand.hbm [shape: f32[1,8,128], index: 2, kind: output, shape index: {}]
  %s3 = sld [smem:[#allocation0]]
  $region18: #{tpu_custom_call.1} parent=0
    _
  %s5 = ssub.s32 1, %s3
  %s6 = scalar_select 0, %s5, %s3
  $region1: #{tpu_custom_call.1} parent=0
    #allocation2 [shape = 'u8[4096]{0}', space=vmem, size = 0x1000, scoped, tag = 'output window, operand 0, single buffered']
    #allocation3 [shape = 's32[1]{0}', space=sflag, size = 0x4, scoped, tag = 'scoped memory for tpu_custom_call.1']
    %7 = vsyncpa [#allocation3], 0
    // Predicated region
    $region2: #{tpu_custom_call.1} parent=1 // pred_check
      _
    $region3: #{tpu_custom_call.1} parent=1 // pred_check_branch
      %9 = sbr.rel (0) target = $region5
    $region4: #{tpu_custom_call.1} parent=1 // pred_region
      _
    $region5: #{tpu_custom_call.1} parent=1 // pred_fallthru
      _
    // Predicated region
    $region6: #{tpu_custom_call.1} parent=1 // pred_check
      _
    $region7: #{tpu_custom_call.1} parent=1 // pred_check_branch
      %11 = sbr.rel (0) target = $region9
    $region8: #{tpu_custom_call.1} parent=1 // pred_region
      _
    $region9: #{tpu_custom_call.1} parent=1 // pred_fallthru
      _
    %v12 = vld [vmem:[%s0] sm:$0xff]
    %v13 = vld [vmem:[%s0 + $0x8] sm:$0xff]
    %vm14 = vcmask 261120
    %v15 = vsel %vm14, %v12, -inf
    %16 = vmax.xlane.f32.xlu0 %v15
    %v17 = vpop.xlane.xlu0 %16
    %v18 = vsel %vm14, %v13, -inf
    %19 = vmax.xlane.f32.xlu0 %v18
    %v20 = vpop.xlane.xlu0 %19
    %v21 = vsub.f32 %v12, %v17
    %v22 = vsub.f32 %v13, %v20
    %v23 = vmul.f32 %v21, 1.442695
    %v24 = vpow.pop %v23
    %v25 = vmul.f32 %v22, 1.442695
    %v26 = vpow.pop %v25
    %v27 = vsel %vm14, %v24, 0.0
    %28 = vadd.xlane.f32.xlu0 %v27
    %v29 = vpop.xlane.xlu0 %28
    %v30 = vsel %vm14, %v26, 0.0
    %31 = vadd.xlane.f32.xlu0 %v30
    %v32 = vpop.xlane.xlu0 %31
    %v33 = vlog2.pop %v29
    %v34 = vmul.f32 %v33, 0.6931472
    %v35 = vlog2.pop %v32
    %v36 = vmul.f32 %v35, 0.6931472
    %v37 = vadd.f32 %v17, %v34
    %v38 = vadd.f32 %v20, %v36
    %v39 = vld [vmem:[%s1] sm:$0xff]
    %v40 = vld [vmem:[%s1 + $0x8] sm:$0xff]
    %v41 = vlaneseq
    %v42 = vand.u32 %v41, 127
    %43 = vset.pattern.permute.xlu0 0
    %44 = vperm.xlu0 %43, %v39
    %v45 = vpop.permute.xlu0 %44
    %46 = vset.pattern.permute.xlu0 0
    %47 = vperm.xlu0 %46, %v40
    %v48 = vpop.permute.xlu0 %47
    %vm49 = vcmp.eq.s32.totalorder %v42, %v45
    %vm50 = vcmp.eq.s32.totalorder %v42, %v48
    %v51 = vsel %vm49, 0.903125, 0.003125
    %v52 = vsel %vm50, 0.903125, 0.003125
    %v53 = vmul.f32 %v51, %v12
    %v54 = vmul.f32 %v52, %v13
    %v55 = vsel %vm14, %v53, 0.0
    %56 = vadd.xlane.f32.xlu0 %v55
    %v57 = vpop.xlane.xlu0 %56
    %v58 = vsel %vm14, %v54, 0.0
    %59 = vadd.xlane.f32.xlu0 %v58
    %v60 = vpop.xlane.xlu0 %59
    %v61 = vsub.f32 %v37, %v57
    %v62 = vsub.f32 %v38, %v60
    %s63 = smul.u32 0, 16
    %v64 = vlaneseq
    %v65 = vshrl.u32 %v64, 7
    %v66 = vadd.s32 %v65, 8
    %v67 = vstv %s63
    %v68 = vadd.s32 %v67, %v65
    %v69 = vadd.s32 %v67, %v66
    %vm70 = vcmp.lt.s32.totalorder %v68, 16
    %vm71 = vcmp.lt.s32.totalorder %v69, 16
    %v72 = vsel %vm70, %v61, 0.0
    %v73 = vsel %vm71, %v62, 0.0
    %vm74 = vcmask 7168
    %v75 = vsel %vm74, %v72, 0.0
    %v76 = vsel %vm74, %v73, 0.0
    %v77 = vadd.f32 %v75, %v76
    %78 = vadd.xlane.f32.xlu0 %v77
    %v79 = vpop.xlane.xlu0 %78
    %v80 = vrot.slane %v79, 4
    %v81 = vadd.f32 %v79, %v80
    %v82 = vrot.slane %v81, 2
    %v83 = vadd.f32 %v81, %v82
    %v84 = vrot.slane %v83, 1
    %v85 = vadd.f32 %v83, %v84
    %s86 = vtos %v85
    %v87 = vstv %s86
    %v88 = vadd.f32 %v87, 0.0
    %89 = vst [vmem:[#allocation2] sm:$0xff] %v88
    // Predicated region
    $region10: #{tpu_custom_call.1} parent=1 // pred_check
      _
    $region11: #{tpu_custom_call.1} parent=1 // pred_check_branch
      %91 = sbr.rel (0) target = $region13
    $region12: #{tpu_custom_call.1} parent=1 // pred_region
      %93 = vsyncadd [#allocation3], 0
      %s95 = sshll.u32 [#allocation2], 4
      %s96 = int_to_ptr.vmem [resolvable:$true] %s95
      %s97 = sshll.u32 %s2, 4
      %s98 = int_to_ptr.hbm [resolvable:$true] %s97
      %100 = dma.vmem_to_hbm [thread:$0]  %s96, 128, %s98, [#allocation3]
    $region13: #{tpu_custom_call.1} parent=1 // pred_fallthru
      _
    // Predicated region
    $region14: #{tpu_custom_call.1} parent=1 // pred_check
      _
    $region15: #{tpu_custom_call.1} parent=1 // pred_check_branch
      %102 = sbr.rel (0) target = $region17
    $region16: #{tpu_custom_call.1} parent=1 // pred_region
      %104 = dma.done [#allocation3], 128
    $region17: #{tpu_custom_call.1} parent=1 // pred_fallthru
      _
    %105 = vsyncpa [#allocation3], 1

</llo_original>
